<compile_context>
chip_gen: v6e
topology: v6e:2x2x1
jax: 0.10.0
libtpu: 0.0.40
codegen_flags: <defaults>
</compile_context>

<pallas_src>
import functools

import jax
import jax.numpy as jnp
from jax.experimental import pallas as pl
from jax.experimental.pallas import tpu as pltpu


def _round_up(v, m):
    return (v + m - 1) // m * m


def _proj_then_gather_kernel(idx_ref, xcat_ref, b_ref, o_ref, *, num_k):
    """Project-then-gather tile (Cout_pad <= C_pad).

    idx_ref  : (1, 1, KR, TN) int32   rows [0..K): center idx, [K..2K): nbr idx + N_pad
    xcat_ref : (1, Cout_pad, 2*N_pad) bf16   [x @ (W1-W2) | x @ W2] along the source axis
    b_ref    : (Cout_pad, 1) f32      bias
    o_ref    : (1, Cout_pad, TN)      output tile (max over K, +bias, ReLU)
    """
    co_pad, tile_n = o_ref.shape[1], o_ref.shape[2]
    n_src = xcat_ref.shape[2]                       # 2 * N_pad

    def body(kk, acc):
        ii = idx_ref[0, 0, pl.ds(kk, 1), :]                 # (1, TN) lane vector
        jj = idx_ref[0, 0, pl.ds(num_k + kk, 1), :]         # (1, TN)
        src = jax.lax.broadcasted_iota(jnp.int32, (n_src, tile_n), 0)
        # Combined one-hot: one 1 in the xp12 half (row ii) and one in the xp2
        # half (row jj + N_pad) per column -> the matmul fuses the "+" of the
        # two EdgeConv terms into the MXU contraction.
        oh = jnp.logical_or(src == ii, src == jj).astype(jnp.bfloat16)
        y = jnp.dot(xcat_ref[0], oh, preferred_element_type=jnp.float32)  # (Cout_pad, TN)
        return jnp.maximum(acc, y)

    acc = jax.lax.fori_loop(
        0, num_k, body, jnp.full((co_pad, tile_n), -jnp.inf, dtype=jnp.float32))
    o_ref[0] = jnp.maximum(acc + b_ref[...], 0.0).astype(o_ref.dtype)


def _gather_then_proj_kernel(idx_ref, x_ref, w12_ref, w2_ref, b_ref, o_ref, *, num_k):
    """Gather-then-project tile (Cout_pad > C_pad).

    idx_ref : (1, 1, KR, TN) int32    rows [0..K): center idx, [K..2K): neighbor idx
    x_ref   : (1, C_pad, N_pad) bf16
    w12_ref : (Cout_pad, C_pad) bf16  (W1 - W2);  w2_ref : (Cout_pad, C_pad) bf16 W2
    b_ref   : (Cout_pad, 1) f32
    o_ref   : (1, Cout_pad, TN)
    """
    co_pad, tile_n = o_ref.shape[1], o_ref.shape[2]
    n_src = x_ref.shape[2]

    def body(kk, acc):
        ii = idx_ref[0, 0, pl.ds(kk, 1), :]
        jj = idx_ref[0, 0, pl.ds(num_k + kk, 1), :]
        src = jax.lax.broadcasted_iota(jnp.int32, (n_src, tile_n), 0)
        oh_i = (src == ii).astype(jnp.bfloat16)
        oh_j = (src == jj).astype(jnp.bfloat16)
        x_i = jnp.dot(x_ref[0], oh_i, preferred_element_type=jnp.bfloat16)  # (C_pad, TN)
        x_j = jnp.dot(x_ref[0], oh_j, preferred_element_type=jnp.bfloat16)
        y = (jnp.dot(w12_ref[...], x_i, preferred_element_type=jnp.float32)
             + jnp.dot(w2_ref[...], x_j, preferred_element_type=jnp.float32))
        return jnp.maximum(acc, y)

    acc = jax.lax.fori_loop(
        0, num_k, body, jnp.full((co_pad, tile_n), -jnp.inf, dtype=jnp.float32))
    o_ref[0] = jnp.maximum(acc + b_ref[...], 0.0).astype(o_ref.dtype)


def graph_conv2d_edge(x_nchw, edge_index, weight, bias, *, prefer_project_first=None):
    """GraphConv2d(conv='edge').forward(x, edge_index, y=None).

    x_nchw     : (B, C, N, 1)      float32
    edge_index : (2, B, N, K)      int
    weight     : (Cout, 2C, 1, 1)  PyTorch Conv2d weight layout
    bias       : (Cout,)
    returns    : (B, Cout, N, 1)   same dtype as x_nchw
    """
    b_sz, c, n, _ = x_nchw.shape
    k = edge_index.shape[-1]
    c_out = weight.shape[0]

    c_pad = _round_up(c, 128)
    co_pad = _round_up(c_out, 128)
    if prefer_project_first is None:
        # Gathering projected features shrinks the dominant gather matmul by
        # C_pad / Cout_pad, so prefer it whenever Cout_pad <= C_pad.
        prefer_project_first = co_pad <= c_pad

    # ---- generation-aware VMEM budget (v7x: 64 MiB/TC, v5e/v6e: 128 MiB) ----
    try:
        vmem_cap = int(pltpu.get_tpu_info().vmem_capacity_bytes)
    except Exception:  # off-device / older jax: assume the smallest (v7x)
        vmem_cap = 64 * 1024 * 1024
    step_budget = int(vmem_cap * 0.40)
    vmem_limit = int(vmem_cap * 0.70)

    kk_rows = _round_up(2 * k, 8)
    out_bytes = jnp.dtype(x_nchw.dtype).itemsize

    def step_bytes(tn):                       # per-grid-step VMEM estimate
        n_p = _round_up(max(n, tn), tn)
        fixed = (2 * kk_rows * tn * 4                      # idx block (x2 buffers)
                 + 2 * co_pad * tn * out_bytes             # out block
                 + 2 * co_pad * 128 * 4)                   # bias (lane-padded)
        if prefer_project_first:
            fixed += 2 * co_pad * (2 * n_p) * 2            # xcat block
            temps = (2 * n_p) * tn * 10 + 2 * co_pad * tn * 4
        else:
            fixed += 2 * c_pad * n_p * 2 + 4 * c_pad * co_pad * 2
            temps = n_p * tn * 20 + 2 * c_pad * tn * 2 + 3 * co_pad * tn * 4
        return fixed + temps

    # tile_n floored at 128 (lane-dense stores / MXU-wide N); raise if it fits.
    tile_n = 128
    for cand in (512, 256):
        if cand <= max(128, _round_up(n, 128)) and step_bytes(cand) <= step_budget:
            tile_n = cand
            break
    n_pad = _round_up(max(n, tile_n), tile_n)
    num_nt = n_pad // tile_n

    # ---- features / weights -------------------------------------------------
    xT = jnp.pad(x_nchw[..., 0].astype(jnp.float32),
                 ((0, 0), (0, 0), (0, n_pad - n)))                # (B, C, N_pad)
    w = weight[:, :, 0, 0].astype(jnp.float32)                    # (Cout, 2C)
    w1, w2 = w[:, :c], w[:, c:]
    w12 = w1 - w2      # cat([x_i, x_j - x_i]) conv  ==  (W1-W2)@x_i + W2@x_j
    bcol = jnp.pad(bias.astype(jnp.float32), (0, co_pad - c_out)).reshape(co_pad, 1)

    # ---- indices: lane-dense (B, nt, 2K_pad, TN), clamped (torch-gather-like)
    def tile_idx(idx):
        idx = jnp.clip(idx.astype(jnp.int32), 0, n - 1)           # (B, N, K)
        idx = jnp.pad(idx, ((0, 0), (0, n_pad - n), (0, 0)))      # padded verts -> 0
        idx = idx.reshape(b_sz, num_nt, tile_n, k)
        return jnp.transpose(idx, (0, 1, 3, 2))                   # (B, nt, K, TN)

    nbr_off = n_pad if prefer_project_first else 0
    idx = jnp.concatenate([tile_idx(edge_index[1]),               # centers  (x_i)
                           tile_idx(edge_index[0]) + nbr_off],    # neighbors (x_j)
                          axis=2)
    idx = jnp.pad(idx, ((0, 0), (0, 0), (0, kk_rows - 2 * k), (0, 0)))

    out_struct = jax.ShapeDtypeStruct((b_sz, co_pad, n_pad), x_nchw.dtype)
    cparams = pltpu.CompilerParams(
        dimension_semantics=("parallel", "parallel"),
        vmem_limit_bytes=vmem_limit)
    idx_spec = pl.BlockSpec((1, 1, kk_rows, tile_n), lambda b, t: (b, t, 0, 0))
    out_spec = pl.BlockSpec((1, co_pad, tile_n), lambda b, t: (b, 0, t))
    bias_spec = pl.BlockSpec((co_pad, 1), lambda b, t: (0, 0))

    if prefer_project_first:
        # Per-batch projection once (f32, exact W1-W2), then bf16 for the MXU gather.
        xp12 = jnp.einsum('oc,bcn->bon', w12, xT)                 # (B, Cout, N_pad)
        xp2 = jnp.einsum('oc,bcn->bon', w2, xT)
        xcat = jnp.concatenate([xp12, xp2], axis=2)               # (B, Cout, 2*N_pad)
        xcat = jnp.pad(xcat, ((0, 0), (0, co_pad - c_out), (0, 0))).astype(jnp.bfloat16)
        out = pl.pallas_call(
            functools.partial(_proj_then_gather_kernel, num_k=k),
            out_shape=out_struct,
            grid=(b_sz, num_nt),
            in_specs=[idx_spec,
                      pl.BlockSpec((1, co_pad, 2 * n_pad), lambda b, t: (b, 0, 0)),
                      bias_spec],
            out_specs=out_spec,
            compiler_params=cparams,
        )(idx, xcat, bcol)
    else:
        x_b = jnp.pad(xT, ((0, 0), (0, c_pad - c), (0, 0))).astype(jnp.bfloat16)
        w12p = jnp.pad(w12, ((0, co_pad - c_out), (0, c_pad - c))).astype(jnp.bfloat16)
        w2p = jnp.pad(w2, ((0, co_pad - c_out), (0, c_pad - c))).astype(jnp.bfloat16)
        out = pl.pallas_call(
            functools.partial(_gather_then_proj_kernel, num_k=k),
            out_shape=out_struct,
            grid=(b_sz, num_nt),
            in_specs=[idx_spec,
                      pl.BlockSpec((1, c_pad, n_pad), lambda b, t: (b, 0, 0)),
                      pl.BlockSpec((co_pad, c_pad), lambda b, t: (0, 0)),
                      pl.BlockSpec((co_pad, c_pad), lambda b, t: (0, 0)),
                      bias_spec],
            out_specs=out_spec,
            compiler_params=cparams,
        )(idx, x_b, w12p, w2p, bcol)

    # Output already channels-first -> just strip padding; no HBM transpose.
    return out[:, :c_out, :n][..., None]                          # (B, Cout, N, 1)


def _reference(x_nchw, edge_index, weight, bias):
    """Pure-JAX f32 reference of EdgeConv2d.forward for a sanity check."""
    b_sz, c, n, _ = x_nchw.shape
    xv = x_nchw[..., 0]                                           # (B, C, N)
    kk = edge_index.shape[-1]

    def gather(idx):                                              # -> (B, C, N, K)
        src = jnp.repeat(xv[:, :, :, None], kk, axis=-1)
        idxb = jnp.broadcast_to(idx[:, None], (b_sz, c) + idx.shape[1:])
        return jnp.take_along_axis(src, idxb, axis=2)

    x_i = gather(edge_index[1])
    x_j = gather(edge_index[0])
    feat = jnp.concatenate([x_i, x_j - x_i], axis=1)              # (B, 2C, N, K)
    w = weight[:, :, 0, 0]                                        # (Cout, 2C)
    y = jnp.einsum('oc,bcnk->bonk', w, feat) + bias[None, :, None, None]
    y = jnp.maximum(y, 0.0)
    return jnp.max(y, axis=-1, keepdims=True)                     # (B, Cout, N, 1)


if __name__ == "__main__":
    key = jax.random.PRNGKey(0)
    k_x, k_e, k_w, k_b = jax.random.split(key, 4)

    B, C, N, K, C_OUT = 2, 4, 16, 8, 8

    x = jax.random.normal(k_x, (B, C, N, 1), dtype=jnp.float32)
    edge_index = jax.random.randint(k_e, (2, B, N, K), 0, N, dtype=jnp.int32)
    # Deterministic parameter init (Conv2d(2C -> Cout, 1x1, bias=True)).
    weight = (jax.random.normal(k_w, (C_OUT, 2 * C, 1, 1), dtype=jnp.float32)
              * (1.0 / jnp.sqrt(2.0 * C)))
    bias = jax.random.normal(k_b, (C_OUT,), dtype=jnp.float32) * 0.1

    ref = _reference(x, edge_index, weight, bias)

    # Auto dispatch (Cout_pad <= C_pad here -> project-then-gather path).
    out_a = jax.block_until_ready(
        jax.jit(graph_conv2d_edge)(x, edge_index, weight, bias))
    assert out_a.shape == (B, C_OUT, N, 1), out_a.shape
    assert jnp.allclose(out_a, ref, atol=5e-2, rtol=5e-2), float(
        jnp.max(jnp.abs(out_a - ref)))

    # Force the gather-then-project path (used when Cout_pad > C_pad) too.
    out_b = jax.block_until_ready(
        jax.jit(functools.partial(graph_conv2d_edge, prefer_project_first=False))(
            x, edge_index, weight, bias))
    assert jnp.allclose(out_b, ref, atol=5e-2, rtol=5e-2), float(
        jnp.max(jnp.abs(out_b - ref)))

    print("KERNEL_OK")
</pallas_src>

<mosaic_0001>
module attributes {stable_mosaic.version = 11 : i64} {
  func.func @_proj_then_gather_kernel(%arg0: i32, %arg1: i32, %arg2: memref<1x1x16x128xi32, #tpu.memory_space<vmem>>, %arg3: memref<1x128x256xbf16, #tpu.memory_space<vmem>>, %arg4: memref<128x1xf32, #tpu.memory_space<vmem>>, %arg5: memref<1x128x128xf32, #tpu.memory_space<vmem>>) attributes {dimension_semantics = [#tpu.dimension_semantics<parallel>, #tpu.dimension_semantics<parallel>], iteration_bounds = array<i64: 2, 1>, scalar_prefetch = 0 : i64, scratch_operands = 0 : i64, tpu.core_type = #tpu.core_type<tc>, window_params = [{transform_indices = @transform_0, window_bounds = array<i64: 1, 1, 16, 128>}, {transform_indices = @transform_1, window_bounds = array<i64: 1, 128, 256>}, {pipeline_mode = #tpu.pipeline_mode<synchronous>, transform_indices = @transform_2, window_bounds = array<i64: 128, 1>}, {transform_indices = @transform_3, window_bounds = array<i64: 1, 128, 128>}]} {
    %cst = arith.constant 0xFF800000 : f32
    %0 = vector.broadcast %cst : f32 to vector<128x128xf32>
    %c0_i32 = arith.constant 0 : i32
    %c8_i32 = arith.constant 8 : i32
    %1 = arith.addi %c0_i32, %c8_i32 : i32
    %c1_i32 = arith.constant 1 : i32
    %2 = scf.for %arg6 = %c0_i32 to %1 step %c1_i32 iter_args(%arg7 = %0) -> (vector<128x128xf32>)  : i32 {
      %c0_6 = arith.constant 0 : index
      %c0_7 = arith.constant 0 : index
      %11 = arith.index_cast %arg6 : i32 to index
      %c0_8 = arith.constant 0 : index
      %12 = vector.load %arg2[%c0_6, %c0_7, %11, %c0_8] : memref<1x1x16x128xi32, #tpu.memory_space<vmem>>, vector<1x1x1x128xi32>
      %13 = vector.shape_cast %12 : vector<1x1x1x128xi32> to vector<1x128xi32>
      %c8_i32_9 = arith.constant 8 : i32
      %14 = arith.addi %c8_i32_9, %arg6 : i32
      %c0_10 = arith.constant 0 : index
      %c0_11 = arith.constant 0 : index
      %15 = arith.index_cast %14 : i32 to index
      %c0_12 = arith.constant 0 : index
      %16 = vector.load %arg2[%c0_10, %c0_11, %15, %c0_12] : memref<1x1x16x128xi32, #tpu.memory_space<vmem>>, vector<1x1x1x128xi32>
      %17 = vector.shape_cast %16 : vector<1x1x1x128xi32> to vector<1x128xi32>
      %18 = tpu.iota {dimensions = array<i32: 0>} : vector<256x128xi32>
      %19 = vector.broadcast %13 : vector<1x128xi32> to vector<256x128xi32>
      %20 = arith.cmpi eq, %18, %19 : vector<256x128xi32>
      %21 = vector.broadcast %17 : vector<1x128xi32> to vector<256x128xi32>
      %22 = arith.cmpi eq, %18, %21 : vector<256x128xi32>
      %23 = arith.ori %20, %22 : vector<256x128xi1>
      %24 = arith.extui %23 : vector<256x128xi1> to vector<256x128xi32>
      %25 = arith.sitofp %24 : vector<256x128xi32> to vector<256x128xf32>
      %26 = arith.truncf %25 : vector<256x128xf32> to vector<256x128xbf16>
      %c0_13 = arith.constant 0 : index
      %c0_14 = arith.constant 0 : index
      %c0_15 = arith.constant 0 : index
      %27 = vector.load %arg3[%c0_13, %c0_14, %c0_15] : memref<1x128x256xbf16, #tpu.memory_space<vmem>>, vector<1x128x256xbf16>
      %28 = vector.shape_cast %27 : vector<1x128x256xbf16> to vector<128x256xbf16>
      %cst_16 = arith.constant dense<0.000000e+00> : vector<128x128xf32>
      %29 = tpu.matmul %28, %26, %cst_16 {dimension_numbers = #tpu.dot_dimension_numbers<[1], [0], [0], [1], [0, 0, 1, 1], [], []>} : vector<128x256xbf16>, vector<256x128xbf16>, vector<128x128xf32> -> vector<128x128xf32>
      %30 = arith.maximumf %arg7, %29 : vector<128x128xf32>
      scf.yield %30 : vector<128x128xf32>
    }
    %c8_i32_0 = arith.constant 8 : i32
    %c0 = arith.constant 0 : index
    %c0_1 = arith.constant 0 : index
    %3 = vector.load %arg4[%c0, %c0_1] : memref<128x1xf32, #tpu.memory_space<vmem>>, vector<128x1xf32>
    %4 = vector.broadcast %3 : vector<128x1xf32> to vector<128x128xf32>
    %5 = arith.addf %2, %4 : vector<128x128xf32>
    %cst_2 = arith.constant 0.000000e+00 : f32
    %6 = vector.broadcast %cst_2 : f32 to vector<128x128xf32>
    %7 = arith.maximumf %5, %6 : vector<128x128xf32>
    %c0_3 = arith.constant 0 : index
    %c0_4 = arith.constant 0 : index
    %c0_5 = arith.constant 0 : index
    %8 = vector.load %arg5[%c0_3, %c0_4, %c0_5] : memref<1x128x128xf32, #tpu.memory_space<vmem>>, vector<1x128x128xf32>
    %9 = vector.shape_cast %8 : vector<1x128x128xf32> to vector<128x128xf32>
    %10 = vector.shape_cast %7 : vector<128x128xf32> to vector<1x128x128xf32>
    tpu.vector_store %arg5[%c0_3, %c0_4, %c0_5], %10 {strides = array<i32>} : memref<1x128x128xf32, #tpu.memory_space<vmem>>, vector<1x128x128xf32>,
    return
  }
  func.func @transform_0(%arg0: i32, %arg1: i32) -> (i32, i32, i32, i32) {
    %c0_i32 = arith.constant 0 : i32
    %c0_i32_0 = arith.constant 0 : i32
    %c0_i32_1 = arith.constant 0 : i32
    return %arg0, %arg1, %c0_i32, %c0_i32_0 : i32, i32, i32, i32
  }
  func.func @transform_1(%arg0: i32, %arg1: i32) -> (i32, i32, i32) {
    %c0_i32 = arith.constant 0 : i32
    %c0_i32_0 = arith.constant 0 : i32
    %c0_i32_1 = arith.constant 0 : i32
    return %arg0, %c0_i32, %c0_i32_0 : i32, i32, i32
  }
  func.func @transform_2(%arg0: i32, %arg1: i32) -> (i32, i32) {
    %c0_i32 = arith.constant 0 : i32
    %c0_i32_0 = arith.constant 0 : i32
    %c0_i32_1 = arith.constant 0 : i32
    return %c0_i32, %c0_i32_0 : i32, i32
  }
  func.func @transform_3(%arg0: i32, %arg1: i32) -> (i32, i32, i32) {
    %c0_i32 = arith.constant 0 : i32
    %c0_i32_0 = arith.constant 0 : i32
    return %arg0, %c0_i32, %arg1 : i32, i32, i32
  }
}

</mosaic_0001>

<llo_original>
// kernel: graph_conv2d_edge.1
$region0: #{graph_conv2d_edge.1}
  #allocation0 [shape = 'u32[]', space=smem, size = 0x4, offset = 0x4, fixed_abs, tag = 'smem constant byte address 0x4 - core index']
  #allocation1 [shape = 'u32[144,128]{1,0:T(1,128)}', space=vmem, size = 0x12000, scoped, tag = 'internal scratch']
  %s0 = inlined_call_operand.vmem [shape: s32[2,1,16,128], index: 0, kind: input, shape index: {}]
  %s1 = inlined_call_operand.vmem [shape: bf16[2,128,256], index: 1, kind: input, shape index: {}]
  %s2 = inlined_call_operand.vmem [shape: f32[128,1], index: 2, kind: input, shape index: {}]
  %s3 = inlined_call_operand.vmem [shape: f32[2,128,128], index: 3, kind: output, shape index: {}]
  %s4 = sld [smem:[#allocation0]]
  $region52: #{graph_conv2d_edge.1} parent=0
    _
  %s6 = ssub.s32 1, %s4
  %s7 = scalar_select 0, %s6, %s4
  loop: start=0, step=1, limit=4
  $region2: #{graph_conv2d_edge.1} parent=0 // loop_pre_header
    _
  $region3: #{graph_conv2d_edge.1} parent=0 // loop_header
    %s9 = sphi 0, %s13
    %p10 = scmp.ge.s32.totalorder %s9, 4
    %s16 = sphi 0, %s28
    %s17 = sphi 0, %s24
    %s18 = sphi 0, %s16
    %s19 = sphi 0, %s17
    %s20 = sphi 0, %s18
    %s21 = sphi 0, %s19
    %s33 = sphi 0, %s35
    %s36 = sphi 0, %s33
    %s37 = sphi 0, %s36
    %s53 = sphi 0, %s37
    %s59 = sphi 0, %s61
    %s62 = sphi 0, %s59
    %s63 = sphi 0, %s62
    %s79 = sphi 0, %s63
    %s83 = sphi 0, %s83
    %s85 = sphi 0, %s83
    %s86 = sphi 0, %s85
    %s100 = sphi 0, %s86
    %s108 = sphi 0, %s110
    %s111 = sphi 0, %s108
    %s112 = sphi 0, %s111
    %s128 = sphi 0, %s112
  $region4: #{graph_conv2d_edge.1} parent=0 // loop_header_branch
    %12 = sbr.rel (%p10) target = $region8
  $region5: #{graph_conv2d_edge.1} parent=0 // loop_body
    %s14 = ssub.s32 %s9, 1
    %s15 = ssub.s32 %s9, 2
    %s22 = sadd.s32 1, %s17
    %p23 = scmp.ge.s32.totalorder %s22, 1
    %s24 = scalar_select %p23, 0, %s22
    %s25 = sadd.s32 1, %s16
    %s26 = scalar_select %p23, %s25, %s16
    %p27 = scmp.ge.s32.totalorder %s26, 2
    %s28 = scalar_select %p27, 0, %s26
    %s29 = ssub.s32 %s16, %s28
    %s30 = ssub.s32 %s17, %s24
    %s31 = sor.u32 %s29, %s30
    %p32 = scmp.eq.s32.totalorder %s31, 0
    %s34 = sadd.s32 %s33, 1
    %s35 = scalar_select %p32, %s33, %s34
    %p38 = pneg %p32
    %p39 = scmp.eq.s32.totalorder %s9, 1
    %p40 = por %p38, %p39
    %p41 = scmp.ne.s32.totalorder %s33, %s36
    %p42 = scmp.eq.s32.totalorder %s9, 0
    %p43 = por %p41, %p42
    %p44 = scmp.ne.s32.totalorder %s33, %s36
    %p45 = scmp.eq.s32.totalorder %s14, 1
    %p46 = por %p44, %p45
    %p47 = scmp.ne.s32.totalorder %s36, %s37
    %p48 = scmp.eq.s32.totalorder %s14, 0
    %p49 = por %p47, %p48
    %p50 = scmp.ne.s32.totalorder %s36, %s37
    %p51 = scmp.eq.s32.totalorder %s15, 1
    %p52 = por %p50, %p51
    %p54 = scmp.ne.s32.totalorder %s37, %s53
    %p55 = scmp.eq.s32.totalorder %s15, 0
    %p56 = por %p54, %p55
    %s57 = ssub.s32 %s16, %s28
    %p58 = scmp.eq.s32.totalorder %s57, 0
    %s60 = sadd.s32 %s59, 1
    %s61 = scalar_select %p58, %s59, %s60
    %p64 = pneg %p58
    %p65 = scmp.eq.s32.totalorder %s9, 1
    %p66 = por %p64, %p65
    %p67 = scmp.ne.s32.totalorder %s59, %s62
    %p68 = scmp.eq.s32.totalorder %s9, 0
    %p69 = por %p67, %p68
    %p70 = scmp.ne.s32.totalorder %s59, %s62
    %p71 = scmp.eq.s32.totalorder %s14, 1
    %p72 = por %p70, %p71
    %p73 = scmp.ne.s32.totalorder %s62, %s63
    %p74 = scmp.eq.s32.totalorder %s14, 0
    %p75 = por %p73, %p74
    %p76 = scmp.ne.s32.totalorder %s62, %s63
    %p77 = scmp.eq.s32.totalorder %s15, 1
    %p78 = por %p76, %p77
    %p80 = scmp.ne.s32.totalorder %s63, %s79
    %p81 = scmp.eq.s32.totalorder %s15, 0
    %p82 = por %p80, %p81
    %s84 = sadd.s32 %s83, 1
    %p87 = scmp.eq.s32.totalorder %s9, 1
    %p88 = scmp.ne.s32.totalorder %s83, %s85
    %p89 = scmp.eq.s32.totalorder %s9, 0
    %p90 = por %p88, %p89
    %p91 = scmp.ne.s32.totalorder %s83, %s85
    %p92 = scmp.eq.s32.totalorder %s14, 1
    %p93 = por %p91, %p92
    %p94 = scmp.ne.s32.totalorder %s85, %s86
    %p95 = scmp.eq.s32.totalorder %s14, 0
    %p96 = por %p94, %p95
    %p97 = scmp.ne.s32.totalorder %s85, %s86
    %p98 = scmp.eq.s32.totalorder %s15, 1
    %p99 = por %p97, %p98
    %p101 = scmp.ne.s32.totalorder %s86, %s100
    %p102 = scmp.eq.s32.totalorder %s15, 0
    %p103 = por %p101, %p102
    %s104 = ssub.s32 %s16, %s28
    %s105 = ssub.s32 %s17, %s24
    %s106 = sor.u32 %s104, %s105
    %p107 = scmp.eq.s32.totalorder %s106, 0
    %s109 = sadd.s32 %s108, 1
    %s110 = scalar_select %p107, %s108, %s109
    %p113 = pneg %p107
    %p114 = scmp.eq.s32.totalorder %s9, 1
    %p115 = por %p113, %p114
    %p116 = scmp.ne.s32.totalorder %s108, %s111
    %p117 = scmp.eq.s32.totalorder %s9, 0
    %p118 = por %p116, %p117
    %p119 = scmp.ne.s32.totalorder %s108, %s111
    %p120 = scmp.eq.s32.totalorder %s14, 1
    %p121 = por %p119, %p120
    %p122 = scmp.ne.s32.totalorder %s111, %s112
    %p123 = scmp.eq.s32.totalorder %s14, 0
    %p124 = por %p122, %p123
    %p125 = scmp.ne.s32.totalorder %s111, %s112
    %p126 = scmp.eq.s32.totalorder %s15, 1
    %p127 = por %p125, %p126
    %p129 = scmp.ne.s32.totalorder %s112, %s128
    %p130 = scmp.eq.s32.totalorder %s15, 0
    %p131 = por %p129, %p130
    %p132 = scmp.le.s32.totalorder 1, %s9
    %p133 = scmp.lt.s32.totalorder %s9, 3
    %p134 = pnand %p132, %p133
    %p135 = pneg %p134
    // Predicated region
    $region9: #{graph_conv2d_edge.1} parent=5 // pred_check
      _
    $region10: #{graph_conv2d_edge.1} parent=5 // pred_check_branch
      %137 = sbr.rel (%p134) target = $region12
    $region11: #{graph_conv2d_edge.1} parent=5 // pred_region
      %s138 = ssub.s32 %s9, 1
      // Predicated region
      $region13: #{graph_conv2d_edge.1} parent=11 // pred_check
        %p139 = pneg %p96
      $region14: #{graph_conv2d_edge.1} parent=11 // pred_check_branch
        %141 = sbr.rel (%p139) target = $region16
      $region15: #{graph_conv2d_edge.1} parent=11 // pred_region
        _
      $region16: #{graph_conv2d_edge.1} parent=11 // pred_fallthru
        _
    $region12: #{graph_conv2d_edge.1} parent=5 // pred_fallthru
      _
    %p142 = scmp.lt.s32.totalorder %s9, 2
    // Predicated region
    $region17: #{graph_conv2d_edge.1} parent=5 // pred_check
      %p143 = pneg %p142
    $region18: #{graph_conv2d_edge.1} parent=5 // pred_check_branch
      %145 = sbr.rel (%p143) target = $region20
    $region19: #{graph_conv2d_edge.1} parent=5 // pred_region
      // Predicated region
      $region21: #{graph_conv2d_edge.1} parent=19 // pred_check
        %p146 = pneg %p43
      $region22: #{graph_conv2d_edge.1} parent=19 // pred_check_branch
        %148 = sbr.rel (%p146) target = $region24
      $region23: #{graph_conv2d_edge.1} parent=19 // pred_region
        %p149 = scmp.lt.s32.totalorder %s16, 1
        %s150 = scalar_select %p149, %s16, 1
        %p151 = scmp.lt.s32.totalorder %s17, 0
        %s152 = scalar_select %p151, %s17, 0
        %s153 = smul.addr %s152, 2
        %s154 = smul.addr %s150, 2
        %s155 = sadd.s32 %s153, %s154
        %s156 = smul.addr %s155, 8
        %s157 = scalar_lea.vmem %s0, %s156
      $region24: #{graph_conv2d_edge.1} parent=19 // pred_fallthru
        _
      // Predicated region
      $region25: #{graph_conv2d_edge.1} parent=19 // pred_check
        %p158 = pneg %p69
      $region26: #{graph_conv2d_edge.1} parent=19 // pred_check_branch
        %160 = sbr.rel (%p158) target = $region28
      $region27: #{graph_conv2d_edge.1} parent=19 // pred_region
        %p161 = scmp.lt.s32.totalorder %s16, 1
        %s162 = scalar_select %p161, %s16, 1
        %s163 = smul.addr %s162, 32
        %s164 = smul.addr %s163, 4
        %s165 = scalar_lea.vmem %s1, %s164
      $region28: #{graph_conv2d_edge.1} parent=19 // pred_fallthru
        _
    $region20: #{graph_conv2d_edge.1} parent=5 // pred_fallthru
      _
    %p166 = scmp.le.s32.totalorder 1, %s9
    %p167 = scmp.lt.s32.totalorder %s9, 3
    %p168 = pnand %p166, %p167
    %p169 = pneg %p168
    // Predicated region
    $region29: #{graph_conv2d_edge.1} parent=5 // pred_check
      _
    $region30: #{graph_conv2d_edge.1} parent=5 // pred_check_branch
      %171 = sbr.rel (%p168) target = $region32
    $region31: #{graph_conv2d_edge.1} parent=5 // pred_region
      %s172 = ssub.s32 %s9, 1
      %p173 = scmp.lt.s32.totalorder %s18, 1
      %s174 = scalar_select %p173, %s18, 1
      %p175 = scmp.lt.s32.totalorder %s19, 0
      %s176 = scalar_select %p175, %s19, 0
      %s177 = smul.addr %s176, 2
      %s178 = smul.addr %s174, 2
      %s179 = sadd.s32 %s177, %s178
      %s180 = smul.addr %s179, 8
      %s181 = scalar_lea.vmem %s0, %s180
      %p182 = pneg %p49
      %p183 = pneg %p46
      %p184 = scmp.lt.s32.totalorder %s18, 1
      %s185 = scalar_select %p184, %s18, 1
      %s186 = smul.addr %s185, 32
      %s187 = smul.addr %s186, 4
      %s188 = scalar_lea.vmem %s1, %s187
      %p189 = pneg %p75
      %p190 = pneg %p72
      %p191 = pneg %p96
      %p192 = pneg %p93
      %p193 = pneg %p124
      %p194 = pneg %p121
      %p195 = scmp.lt.s32.totalorder %s18, 1
      %s196 = scalar_select %p195, %s18, 1
      %p197 = scmp.lt.s32.totalorder %s19, 0
      %s198 = scalar_select %p197, %s19, 0
      %s199 = smul.addr %s196, 16
      %s200 = sadd.s32 %s198, %s199
      %s201 = smul.addr %s200, 8
      %s202 = scalar_lea.vmem %s3, %s201
      %p203 = scmp.lt.s32.totalorder %s18, 1
      %s204 = scalar_select %p203, %s18, 1
      %p205 = scmp.lt.s32.totalorder %s19, 0
      %s206 = scalar_select %p205, %s19, 0
      %s207 = smul.addr %s206, 2
      %s208 = smul.addr %s204, 2
      %s209 = sadd.s32 %s207, %s208
      %s210 = smul.addr %s209, 8
      %s211 = scalar_lea.vmem %s0, %s210
      %p212 = scmp.lt.s32.totalorder %s18, 1
      %s213 = scalar_select %p212, %s18, 1
      %s214 = smul.addr %s213, 32
      %s215 = smul.addr %s214, 4
      %s216 = scalar_lea.vmem %s1, %s215
      %p217 = scmp.lt.s32.totalorder %s18, 1
      %s218 = scalar_select %p217, %s18, 1
      %p219 = scmp.lt.s32.totalorder %s19, 0
      %s220 = scalar_select %p219, %s19, 0
      %s221 = smul.addr %s218, 16
      %s222 = sadd.s32 %s220, %s221
      %s223 = smul.addr %s222, 8
      %s224 = scalar_lea.vmem %s3, %s223
      loop: start=0, step=1, limit=8
      $region33: #{graph_conv2d_edge.1} parent=31 // loop_pre_header
        _
      $region34: #{graph_conv2d_edge.1} parent=31 // loop_header
        %s227 = sphi 0, %s231
        %p228 = scmp.ge.s32.totalorder %s227, 8
        %v232 = vphi -inf, %v663
        %v233 = vphi -inf, %v664
        %v234 = vphi -inf, %v665
        %v235 = vphi -inf, %v666
        %v236 = vphi -inf, %v667
        %v237 = vphi -inf, %v668
        %v238 = vphi -inf, %v669
        %v239 = vphi -inf, %v670
        %v240 = vphi -inf, %v671
        %v241 = vphi -inf, %v672
        %v242 = vphi -inf, %v673
        %v243 = vphi -inf, %v674
        %v244 = vphi -inf, %v675
        %v245 = vphi -inf, %v676
        %v246 = vphi -inf, %v677
        %v247 = vphi -inf, %v678
      $region35: #{graph_conv2d_edge.1} parent=31 // loop_header_branch
        %230 = sbr.rel (%p228) target = $region39
      $region36: #{graph_conv2d_edge.1} parent=31 // loop_body
        %s248 = scalar_lea.vmem %s211, %s227
        %v249 = vld [vmem:[%s248] sm:$0x1]
        %s250 = sadd.s32 %s227, 8
        %s251 = scalar_lea.vmem %s211, %s250
        %v252 = vld [vmem:[%s251] sm:$0x1]
        %v253 = vlaneseq
        %v254 = vshrl.u32 %v253, 7
        %v255 = vadd.s32 %v254, 8
        %v256 = vadd.s32 %v254, 16
        %v257 = vadd.s32 %v254, 24
        %v258 = vadd.s32 %v254, 32
        %v259 = vadd.s32 %v254, 40
        %v260 = vadd.s32 %v254, 48
        %v261 = vadd.s32 %v254, 56
        %v262 = vadd.s32 %v254, 64
        %v263 = vadd.s32 %v254, 72
        %v264 = vadd.s32 %v254, 80
        %v265 = vadd.s32 %v254, 88
        %v266 = vadd.s32 %v254, 96
        %v267 = vadd.s32 %v254, 104
        %v268 = vadd.s32 %v254, 112
        %v269 = vadd.s32 %v254, 120
        %v270 = vadd.s32 %v254, 128
        %v271 = vadd.s32 %v254, 136
        %v272 = vadd.s32 %v254, 144
        %v273 = vadd.s32 %v254, 152
        %v274 = vadd.s32 %v254, 160
        %v275 = vadd.s32 %v254, 168
        %v276 = vadd.s32 %v254, 176
        %v277 = vadd.s32 %v254, 184
        %v278 = vadd.s32 %v254, 192
        %v279 = vadd.s32 %v254, 200
        %v280 = vadd.s32 %v254, 208
        %v281 = vadd.s32 %v254, 216
        %v282 = vadd.s32 %v254, 224
        %v283 = vadd.s32 %v254, 232
        %v284 = vadd.s32 %v254, 240
        %v285 = vadd.s32 %v254, 248
        %v286 = vlaneseq
        %v287 = vshrl.u32 %v286, 7
        %v288 = vsub.s32 0, %v287
        %v289 = vrot.slane %v249, %v288
        %vm290 = vcmp.eq.s32.totalorder %v254, %v289
        %vm291 = vcmp.eq.s32.totalorder %v255, %v289
        %vm292 = vcmp.eq.s32.totalorder %v256, %v289
        %vm293 = vcmp.eq.s32.totalorder %v257, %v289
        %vm294 = vcmp.eq.s32.totalorder %v258, %v289
        %vm295 = vcmp.eq.s32.totalorder %v259, %v289
        %vm296 = vcmp.eq.s32.totalorder %v260, %v289
        %vm297 = vcmp.eq.s32.totalorder %v261, %v289
        %vm298 = vcmp.eq.s32.totalorder %v262, %v289
        %vm299 = vcmp.eq.s32.totalorder %v263, %v289
        %vm300 = vcmp.eq.s32.totalorder %v264, %v289
        %vm301 = vcmp.eq.s32.totalorder %v265, %v289
        %vm302 = vcmp.eq.s32.totalorder %v266, %v289
        %vm303 = vcmp.eq.s32.totalorder %v267, %v289
        %vm304 = vcmp.eq.s32.totalorder %v268, %v289
        %vm305 = vcmp.eq.s32.totalorder %v269, %v289
        %vm306 = vcmp.eq.s32.totalorder %v270, %v289
        %vm307 = vcmp.eq.s32.totalorder %v271, %v289
        %vm308 = vcmp.eq.s32.totalorder %v272, %v289
        %vm309 = vcmp.eq.s32.totalorder %v273, %v289
        %vm310 = vcmp.eq.s32.totalorder %v274, %v289
        %vm311 = vcmp.eq.s32.totalorder %v275, %v289
        %vm312 = vcmp.eq.s32.totalorder %v276, %v289
        %vm313 = vcmp.eq.s32.totalorder %v277, %v289
        %vm314 = vcmp.eq.s32.totalorder %v278, %v289
        %vm315 = vcmp.eq.s32.totalorder %v279, %v289
        %vm316 = vcmp.eq.s32.totalorder %v280, %v289
        %vm317 = vcmp.eq.s32.totalorder %v281, %v289
        %vm318 = vcmp.eq.s32.totalorder %v282, %v289
        %vm319 = vcmp.eq.s32.totalorder %v283, %v289
        %vm320 = vcmp.eq.s32.totalorder %v284, %v289
        %vm321 = vcmp.eq.s32.totalorder %v285, %v289
        %v322 = vlaneseq
        %v323 = vshrl.u32 %v322, 7
        %v324 = vsub.s32 0, %v323
        %v325 = vrot.slane %v252, %v324
        %vm326 = vcmp.eq.s32.totalorder %v254, %v325
        %vm327 = vcmp.eq.s32.totalorder %v255, %v325
        %vm328 = vcmp.eq.s32.totalorder %v256, %v325
        %vm329 = vcmp.eq.s32.totalorder %v257, %v325
        %vm330 = vcmp.eq.s32.totalorder %v258, %v325
        %vm331 = vcmp.eq.s32.totalorder %v259, %v325
        %vm332 = vcmp.eq.s32.totalorder %v260, %v325
        %vm333 = vcmp.eq.s32.totalorder %v261, %v325
        %vm334 = vcmp.eq.s32.totalorder %v262, %v325
        %vm335 = vcmp.eq.s32.totalorder %v263, %v325
        %vm336 = vcmp.eq.s32.totalorder %v264, %v325
        %vm337 = vcmp.eq.s32.totalorder %v265, %v325
        %vm338 = vcmp.eq.s32.totalorder %v266, %v325
        %vm339 = vcmp.eq.s32.totalorder %v267, %v325
        %vm340 = vcmp.eq.s32.totalorder %v268, %v325
        %vm341 = vcmp.eq.s32.totalorder %v269, %v325
        %vm342 = vcmp.eq.s32.totalorder %v270, %v325
        %vm343 = vcmp.eq.s32.totalorder %v271, %v325
        %vm344 = vcmp.eq.s32.totalorder %v272, %v325
        %vm345 = vcmp.eq.s32.totalorder %v273, %v325
        %vm346 = vcmp.eq.s32.totalorder %v274, %v325
        %vm347 = vcmp.eq.s32.totalorder %v275, %v325
        %vm348 = vcmp.eq.s32.totalorder %v276, %v325
        %vm349 = vcmp.eq.s32.totalorder %v277, %v325
        %vm350 = vcmp.eq.s32.totalorder %v278, %v325
        %vm351 = vcmp.eq.s32.totalorder %v279, %v325
        %vm352 = vcmp.eq.s32.totalorder %v280, %v325
        %vm353 = vcmp.eq.s32.totalorder %v281, %v325
        %vm354 = vcmp.eq.s32.totalorder %v282, %v325
        %vm355 = vcmp.eq.s32.totalorder %v283, %v325
        %vm356 = vcmp.eq.s32.totalorder %v284, %v325
        %vm357 = vcmp.eq.s32.totalorder %v285, %v325
        %vm358 = vmor %vm290, %vm326
        %vm359 = vmor %vm291, %vm327
        %vm360 = vmor %vm292, %vm328
        %vm361 = vmor %vm293, %vm329
        %vm362 = vmor %vm294, %vm330
        %vm363 = vmor %vm295, %vm331
        %vm364 = vmor %vm296, %vm332
        %vm365 = vmor %vm297, %vm333
        %vm366 = vmor %vm298, %vm334
        %vm367 = vmor %vm299, %vm335
        %vm368 = vmor %vm300, %vm336
        %vm369 = vmor %vm301, %vm337
        %vm370 = vmor %vm302, %vm338
        %vm371 = vmor %vm303, %vm339
        %vm372 = vmor %vm304, %vm340
        %vm373 = vmor %vm305, %vm341
        %vm374 = vmor %vm306, %vm342
        %vm375 = vmor %vm307, %vm343
        %vm376 = vmor %vm308, %vm344
        %vm377 = vmor %vm309, %vm345
        %vm378 = vmor %vm310, %vm346
        %vm379 = vmor %vm311, %vm347
        %vm380 = vmor %vm312, %vm348
        %vm381 = vmor %vm313, %vm349
        %vm382 = vmor %vm314, %vm350
        %vm383 = vmor %vm315, %vm351
        %vm384 = vmor %vm316, %vm352
        %vm385 = vmor %vm317, %vm353
        %vm386 = vmor %vm318, %vm354
        %vm387 = vmor %vm319, %vm355
        %vm388 = vmor %vm320, %vm356
        %vm389 = vmor %vm321, %vm357
        %v390 = vsel %vm358, 1, 0
        %v391 = vsel %vm359, 1, 0
        %v392 = vsel %vm360, 1, 0
        %v393 = vsel %vm361, 1, 0
        %v394 = vsel %vm362, 1, 0
        %v395 = vsel %vm363, 1, 0
        %v396 = vsel %vm364, 1, 0
        %v397 = vsel %vm365, 1, 0
        %v398 = vsel %vm366, 1, 0
        %v399 = vsel %vm367, 1, 0
        %v400 = vsel %vm368, 1, 0
        %v401 = vsel %vm369, 1, 0
        %v402 = vsel %vm370, 1, 0
        %v403 = vsel %vm371, 1, 0
        %v404 = vsel %vm372, 1, 0
        %v405 = vsel %vm373, 1, 0
        %v406 = vsel %vm374, 1, 0
        %v407 = vsel %vm375, 1, 0
        %v408 = vsel %vm376, 1, 0
        %v409 = vsel %vm377, 1, 0
        %v410 = vsel %vm378, 1, 0
        %v411 = vsel %vm379, 1, 0
        %v412 = vsel %vm380, 1, 0
        %v413 = vsel %vm381, 1, 0
        %v414 = vsel %vm382, 1, 0
        %v415 = vsel %vm383, 1, 0
        %v416 = vsel %vm384, 1, 0
        %v417 = vsel %vm385, 1, 0
        %v418 = vsel %vm386, 1, 0
        %v419 = vsel %vm387, 1, 0
        %v420 = vsel %vm388, 1, 0
        %v421 = vsel %vm389, 1, 0
        %v422 = vcvt.s32.f32 %v390
        %v423 = vcvt.s32.f32 %v391
        %v424 = vcvt.s32.f32 %v392
        %v425 = vcvt.s32.f32 %v393
        %v426 = vcvt.s32.f32 %v394
        %v427 = vcvt.s32.f32 %v395
        %v428 = vcvt.s32.f32 %v396
        %v429 = vcvt.s32.f32 %v397
        %v430 = vcvt.s32.f32 %v398
        %v431 = vcvt.s32.f32 %v399
        %v432 = vcvt.s32.f32 %v400
        %v433 = vcvt.s32.f32 %v401
        %v434 = vcvt.s32.f32 %v402
        %v435 = vcvt.s32.f32 %v403
        %v436 = vcvt.s32.f32 %v404
        %v437 = vcvt.s32.f32 %v405
        %v438 = vcvt.s32.f32 %v406
        %v439 = vcvt.s32.f32 %v407
        %v440 = vcvt.s32.f32 %v408
        %v441 = vcvt.s32.f32 %v409
        %v442 = vcvt.s32.f32 %v410
        %v443 = vcvt.s32.f32 %v411
        %v444 = vcvt.s32.f32 %v412
        %v445 = vcvt.s32.f32 %v413
        %v446 = vcvt.s32.f32 %v414
        %v447 = vcvt.s32.f32 %v415
        %v448 = vcvt.s32.f32 %v416
        %v449 = vcvt.s32.f32 %v417
        %v450 = vcvt.s32.f32 %v418
        %v451 = vcvt.s32.f32 %v419
        %v452 = vcvt.s32.f32 %v420
        %v453 = vcvt.s32.f32 %v421
        %v454 = vpack.c.bf16 %v423, %v422
        %v455 = vpack.c.bf16 %v425, %v424
        %v456 = vpack.c.bf16 %v427, %v426
        %v457 = vpack.c.bf16 %v429, %v428
        %v458 = vpack.c.bf16 %v431, %v430
        %v459 = vpack.c.bf16 %v433, %v432
        %v460 = vpack.c.bf16 %v435, %v434
        %v461 = vpack.c.bf16 %v437, %v436
        %v462 = vpack.c.bf16 %v439, %v438
        %v463 = vpack.c.bf16 %v441, %v440
        %v464 = vpack.c.bf16 %v443, %v442
        %v465 = vpack.c.bf16 %v445, %v444
        %v466 = vpack.c.bf16 %v447, %v446
        %v467 = vpack.c.bf16 %v449, %v448
        %v468 = vpack.c.bf16 %v451, %v450
        %v469 = vpack.c.bf16 %v453, %v452
        %v470 = vld [vmem:[%s216] sm:$0xff]
        %v471 = vld [vmem:[%s216 + $0x8] sm:$0xff]
        %v472 = vld [vmem:[%s216 + $0x10] sm:$0xff]
        %v473 = vld [vmem:[%s216 + $0x18] sm:$0xff]
        %v474 = vld [vmem:[%s216 + $0x20] sm:$0xff]
        %v475 = vld [vmem:[%s216 + $0x28] sm:$0xff]
        %v476 = vld [vmem:[%s216 + $0x30] sm:$0xff]
        %v477 = vld [vmem:[%s216 + $0x38] sm:$0xff]
        %v478 = vld [vmem:[%s216 + $0x40] sm:$0xff]
        %v479 = vld [vmem:[%s216 + $0x48] sm:$0xff]
        %v480 = vld [vmem:[%s216 + $0x50] sm:$0xff]
        %v481 = vld [vmem:[%s216 + $0x58] sm:$0xff]
        %v482 = vld [vmem:[%s216 + $0x60] sm:$0xff]
        %v483 = vld [vmem:[%s216 + $0x68] sm:$0xff]
        %v484 = vld [vmem:[%s216 + $0x70] sm:$0xff]
        %v485 = vld [vmem:[%s216 + $0x78] sm:$0xff]
        %v502 = vunpack.c.l.b16 %v470
        %v503 = vunpack.c.h.b16 %v470
        %v504 = vunpack.c.l.b16 %v471
        %v505 = vunpack.c.h.b16 %v471
        %v506 = vunpack.c.l.b16 %v472
        %v507 = vunpack.c.h.b16 %v472
        %v508 = vunpack.c.l.b16 %v473
        %v509 = vunpack.c.h.b16 %v473
        %v510 = vunpack.c.l.b16 %v474
        %v511 = vunpack.c.h.b16 %v474
        %v512 = vunpack.c.l.b16 %v475
        %v513 = vunpack.c.h.b16 %v475
        %v514 = vunpack.c.l.b16 %v476
        %v515 = vunpack.c.h.b16 %v476
        %v516 = vunpack.c.l.b16 %v477
        %v517 = vunpack.c.h.b16 %v477
        %v518 = vunpack.c.l.b16 %v478
        %v519 = vunpack.c.h.b16 %v478
        %v520 = vunpack.c.l.b16 %v479
        %v521 = vunpack.c.h.b16 %v479
        %v522 = vunpack.c.l.b16 %v480
        %v523 = vunpack.c.h.b16 %v480
        %v524 = vunpack.c.l.b16 %v481
        %v525 = vunpack.c.h.b16 %v481
        %v526 = vunpack.c.l.b16 %v482
        %v527 = vunpack.c.h.b16 %v482
        %v528 = vunpack.c.l.b16 %v483
        %v529 = vunpack.c.h.b16 %v483
        %v530 = vunpack.c.l.b16 %v484
        %v531 = vunpack.c.h.b16 %v484
        %v532 = vunpack.c.l.b16 %v485
        %v533 = vunpack.c.h.b16 %v485
        %v534 = vpack.c.b16 %v504, %v502
        %v535 = vpack.c.b16 %v505, %v503
        %v536 = vpack.c.b16 %v508, %v506
        %v537 = vpack.c.b16 %v509, %v507
        %v538 = vpack.c.b16 %v512, %v510
        %v539 = vpack.c.b16 %v513, %v511
        %v540 = vpack.c.b16 %v516, %v514
        %v541 = vpack.c.b16 %v517, %v515
        %v542 = vpack.c.b16 %v520, %v518
        %v543 = vpack.c.b16 %v521, %v519
        %v544 = vpack.c.b16 %v524, %v522
        %v545 = vpack.c.b16 %v525, %v523
        %v546 = vpack.c.b16 %v528, %v526
        %v547 = vpack.c.b16 %v529, %v527
        %v548 = vpack.c.b16 %v532, %v530
        %v549 = vpack.c.b16 %v533, %v531
        %566 = vmatprep.subr.bf16.mxu0 0
        %567 = vmatpush1.bf16.msra.mxu0 %v461
        %568 = vmatprep.subr.bf16.mxu0 0
        %569 = vmatpush1.bf16.msra.mxu0 %v460
        %570 = vmatprep.subr.bf16.mxu0 0
        %571 = vmatpush1.bf16.msra.mxu0 %v459
        %572 = vmatprep.subr.bf16.mxu0 0
        %573 = vmatpush1.bf16.msra.mxu0 %v458
        %574 = vmatprep.subr.bf16.mxu0 0
        %575 = vmatpush1.bf16.msra.mxu0 %v457
        %576 = vmatprep.subr.bf16.mxu0 0
        %577 = vmatpush1.bf16.msra.mxu0 %v456
        %578 = vmatprep.subr.bf16.mxu0 0
        %579 = vmatpush1.bf16.msra.mxu0 %v455
        %580 = vmatprep.subr.bf16.mxu0 0
        %581 = vmatpush1.bf16.msra.mxu0 %v454
        %582 = vmatprep.subr.bf16.mxu0 0
        %583 = vmatpush2.bf16.msra.mxu0 %v469
        %584 = vmatprep.subr.bf16.mxu0 0
        %585 = vmatpush2.bf16.msra.mxu0 %v468
        %586 = vmatprep.subr.bf16.mxu0 0
        %587 = vmatpush2.bf16.msra.mxu0 %v467
        %588 = vmatprep.subr.bf16.mxu0 0
        %589 = vmatpush2.bf16.msra.mxu0 %v466
        %590 = vmatprep.subr.bf16.mxu0 0
        %591 = vmatpush2.bf16.msra.mxu0 %v465
        %592 = vmatprep.subr.bf16.mxu0 0
        %593 = vmatpush2.bf16.msra.mxu0 %v464
        %594 = vmatprep.subr.bf16.mxu0 0
        %595 = vmatpush2.bf16.msra.mxu0 %v463
        %596 = vmatprep.subr.bf16.mxu0 0
        %597 = vmatpush2.bf16.msra.mxu0 %v462
        %598 = vmatprep.mubr.bf16.mxu0 %v535
        %599 = vmatmul.mubr.bf16.gmra.mxu0 %v534
        %v600 = vpop.f32.mrf.mxu0
        %v601 = vadd.f32 0.0, %v600
        %v602 = vpop.f32.mrf.mxu0
        %v603 = vpop.f32.mrf.mxu0
        %v604 = vadd.f32 0.0, %v603
        %v605 = vpop.f32.mrf.mxu0
        %606 = vmatprep.mubr.bf16.mxu0 %v537
        %607 = vmatmul.mubr.bf16.gmra.mxu0 %v536
        %v608 = vpop.f32.mrf.mxu0
        %v609 = vadd.f32 0.0, %v608
        %v610 = vpop.f32.mrf.mxu0
        %v611 = vpop.f32.mrf.mxu0
        %v612 = vadd.f32 0.0, %v611
        %v613 = vpop.f32.mrf.mxu0
        %614 = vmatprep.mubr.bf16.mxu0 %v539
        %615 = vmatmul.mubr.bf16.gmra.mxu0 %v538
        %v616 = vpop.f32.mrf.mxu0
        %v617 = vadd.f32 0.0, %v616
        %v618 = vpop.f32.mrf.mxu0
        %v619 = vpop.f32.mrf.mxu0
        %v620 = vadd.f32 0.0, %v619
        %v621 = vpop.f32.mrf.mxu0
        %622 = vmatprep.mubr.bf16.mxu0 %v541
        %623 = vmatmul.mubr.bf16.gmra.mxu0 %v540
        %v624 = vpop.f32.mrf.mxu0
        %v625 = vadd.f32 0.0, %v624
        %v626 = vpop.f32.mrf.mxu0
        %v627 = vpop.f32.mrf.mxu0
        %v628 = vadd.f32 0.0, %v627
        %v629 = vpop.f32.mrf.mxu0
        %630 = vmatprep.mubr.bf16.mxu0 %v543
        %631 = vmatmul.mubr.bf16.gmra.mxu0 %v542
        %v632 = vpop.f32.mrf.mxu0
        %v633 = vadd.f32 0.0, %v632
        %v634 = vpop.f32.mrf.mxu0
        %v635 = vpop.f32.mrf.mxu0
        %v636 = vadd.f32 0.0, %v635
        %v637 = vpop.f32.mrf.mxu0
        %638 = vmatprep.mubr.bf16.mxu0 %v545
        %639 = vmatmul.mubr.bf16.gmra.mxu0 %v544
        %v640 = vpop.f32.mrf.mxu0
        %v641 = vadd.f32 0.0, %v640
        %v642 = vpop.f32.mrf.mxu0
        %v643 = vpop.f32.mrf.mxu0
        %v644 = vadd.f32 0.0, %v643
        %v645 = vpop.f32.mrf.mxu0
        %646 = vmatprep.mubr.bf16.mxu0 %v547
        %647 = vmatmul.mubr.bf16.gmra.mxu0 %v546
        %v648 = vpop.f32.mrf.mxu0
        %v649 = vadd.f32 0.0, %v648
        %v650 = vpop.f32.mrf.mxu0
        %v651 = vpop.f32.mrf.mxu0
        %v652 = vadd.f32 0.0, %v651
        %v653 = vpop.f32.mrf.mxu0
        %654 = vmatprep.mubr.bf16.mxu0 %v549
        %655 = vmatmul.mubr.bf16.gmra.mxu0 %v548
        %v656 = vpop.f32.mrf.mxu0
        %v657 = vadd.f32 0.0, %v656
        %v658 = vpop.f32.mrf.mxu0
        %v659 = vpop.f32.mrf.mxu0
        %v660 = vadd.f32 0.0, %v659
        %v661 = vpop.f32.mrf.mxu0
        %662 = vdwg.mxu0
        %v663 = vmax.f32 %v232, %v601
        %v664 = vmax.f32 %v233, %v604
        %v665 = vmax.f32 %v234, %v609
        %v666 = vmax.f32 %v235, %v612
        %v667 = vmax.f32 %v236, %v617
        %v668 = vmax.f32 %v237, %v620
        %v669 = vmax.f32 %v238, %v625
        %v670 = vmax.f32 %v239, %v628
        %v671 = vmax.f32 %v240, %v633
        %v672 = vmax.f32 %v241, %v636
        %v673 = vmax.f32 %v242, %v641
        %v674 = vmax.f32 %v243, %v644
        %v675 = vmax.f32 %v244, %v649
        %v676 = vmax.f32 %v245, %v652
        %v677 = vmax.f32 %v246, %v657
        %v678 = vmax.f32 %v247, %v660
      $region37: #{graph_conv2d_edge.1} parent=31 // loop_footer
        %s231 = sadd.s32 1, %s227
      $region38: #{graph_conv2d_edge.1} parent=31 // loop_footer_branch
        %226 = sbr.rel target = $region34
      $region39: #{graph_conv2d_edge.1} parent=31 // loop_exit
        _
      %v679 = vld [vmem:[%s2] sm:$0xff]
      %v680 = vld [vmem:[%s2 + $0x8] sm:$0xff]
      %v681 = vld [vmem:[%s2 + $0x10] sm:$0xff]
      %v682 = vld [vmem:[%s2 + $0x18] sm:$0xff]
      %v683 = vld [vmem:[%s2 + $0x20] sm:$0xff]
      %v684 = vld [vmem:[%s2 + $0x28] sm:$0xff]
      %v685 = vld [vmem:[%s2 + $0x30] sm:$0xff]
      %v686 = vld [vmem:[%s2 + $0x38] sm:$0xff]
      %v687 = vld [vmem:[%s2 + $0x40] sm:$0xff]
      %v688 = vld [vmem:[%s2 + $0x48] sm:$0xff]
      %v689 = vld [vmem:[%s2 + $0x50] sm:$0xff]
      %v690 = vld [vmem:[%s2 + $0x58] sm:$0xff]
      %v691 = vld [vmem:[%s2 + $0x60] sm:$0xff]
      %v692 = vld [vmem:[%s2 + $0x68] sm:$0xff]
      %v693 = vld [vmem:[%s2 + $0x70] sm:$0xff]
      %v694 = vld [vmem:[%s2 + $0x78] sm:$0xff]
      %696 = vset.pattern.permute.xlu0 0
      %697 = vperm.xlu0 %696, %v679
      %v698 = vpop.permute.xlu0 %697
      %701 = vset.pattern.permute.xlu0 0
      %702 = vperm.xlu0 %701, %v680
      %v703 = vpop.permute.xlu0 %702
      %706 = vset.pattern.permute.xlu0 0
      %707 = vperm.xlu0 %706, %v681
      %v708 = vpop.permute.xlu0 %707
      %711 = vset.pattern.permute.xlu0 0
      %712 = vperm.xlu0 %711, %v682
      %v713 = vpop.permute.xlu0 %712
      %716 = vset.pattern.permute.xlu0 0
      %717 = vperm.xlu0 %716, %v683
      %v718 = vpop.permute.xlu0 %717
      %721 = vset.pattern.permute.xlu0 0
      %722 = vperm.xlu0 %721, %v684
      %v723 = vpop.permute.xlu0 %722
      %726 = vset.pattern.permute.xlu0 0
      %727 = vperm.xlu0 %726, %v685
      %v728 = vpop.permute.xlu0 %727
      %731 = vset.pattern.permute.xlu0 0
      %732 = vperm.xlu0 %731, %v686
      %v733 = vpop.permute.xlu0 %732
      %736 = vset.pattern.permute.xlu0 0
      %737 = vperm.xlu0 %736, %v687
      %v738 = vpop.permute.xlu0 %737
      %741 = vset.pattern.permute.xlu0 0
      %742 = vperm.xlu0 %741, %v688
      %v743 = vpop.permute.xlu0 %742
      %746 = vset.pattern.permute.xlu0 0
      %747 = vperm.xlu0 %746, %v689
      %v748 = vpop.permute.xlu0 %747
      %751 = vset.pattern.permute.xlu0 0
      %752 = vperm.xlu0 %751, %v690
      %v753 = vpop.permute.xlu0 %752
      %756 = vset.pattern.permute.xlu0 0
      %757 = vperm.xlu0 %756, %v691
      %v758 = vpop.permute.xlu0 %757
      %761 = vset.pattern.permute.xlu0 0
      %762 = vperm.xlu0 %761, %v692
      %v763 = vpop.permute.xlu0 %762
      %766 = vset.pattern.permute.xlu0 0
      %767 = vperm.xlu0 %766, %v693
      %v768 = vpop.permute.xlu0 %767
      %771 = vset.pattern.permute.xlu0 0
      %772 = vperm.xlu0 %771, %v694
      %v773 = vpop.permute.xlu0 %772
      %v775 = vadd.f32 %v232, %v698
      %v776 = vadd.f32 %v233, %v703
      %v777 = vadd.f32 %v234, %v708
      %v778 = vadd.f32 %v235, %v713
      %v779 = vadd.f32 %v236, %v718
      %v780 = vadd.f32 %v237, %v723
      %v781 = vadd.f32 %v238, %v728
      %v782 = vadd.f32 %v239, %v733
      %v783 = vadd.f32 %v240, %v738
      %v784 = vadd.f32 %v241, %v743
      %v785 = vadd.f32 %v242, %v748
      %v786 = vadd.f32 %v243, %v753
      %v787 = vadd.f32 %v244, %v758
      %v788 = vadd.f32 %v245, %v763
      %v789 = vadd.f32 %v246, %v768
      %v790 = vadd.f32 %v247, %v773
      %v791 = vmax.f32 %v775, 0.0
      %v792 = vmax.f32 %v776, 0.0
      %v793 = vmax.f32 %v777, 0.0
      %v794 = vmax.f32 %v778, 0.0
      %v795 = vmax.f32 %v779, 0.0
      %v796 = vmax.f32 %v780, 0.0
      %v797 = vmax.f32 %v781, 0.0
      %v798 = vmax.f32 %v782, 0.0
      %v799 = vmax.f32 %v783, 0.0
      %v800 = vmax.f32 %v784, 0.0
      %v801 = vmax.f32 %v785, 0.0
      %v802 = vmax.f32 %v786, 0.0
      %v803 = vmax.f32 %v787, 0.0
      %v804 = vmax.f32 %v788, 0.0
      %v805 = vmax.f32 %v789, 0.0
      %v806 = vmax.f32 %v790, 0.0
      %807 = vst [vmem:[%s224] sm:$0xff] %v791
      %808 = vst [vmem:[%s224 + $0x8] sm:$0xff] %v792
      %809 = vst [vmem:[%s224 + $0x10] sm:$0xff] %v793
      %810 = vst [vmem:[%s224 + $0x18] sm:$0xff] %v794
      %811 = vst [vmem:[%s224 + $0x20] sm:$0xff] %v795
      %812 = vst [vmem:[%s224 + $0x28] sm:$0xff] %v796
      %813 = vst [vmem:[%s224 + $0x30] sm:$0xff] %v797
      %814 = vst [vmem:[%s224 + $0x38] sm:$0xff] %v798
      %815 = vst [vmem:[%s224 + $0x40] sm:$0xff] %v799
      %816 = vst [vmem:[%s224 + $0x48] sm:$0xff] %v800
      %817 = vst [vmem:[%s224 + $0x50] sm:$0xff] %v801
      %818 = vst [vmem:[%s224 + $0x58] sm:$0xff] %v802
      %819 = vst [vmem:[%s224 + $0x60] sm:$0xff] %v803
      %820 = vst [vmem:[%s224 + $0x68] sm:$0xff] %v804
      %821 = vst [vmem:[%s224 + $0x70] sm:$0xff] %v805
      %822 = vst [vmem:[%s224 + $0x78] sm:$0xff] %v806
      %p823 = scmp.lt.s32.totalorder %s18, 1
      %s824 = scalar_select %p823, %s18, 1
      %p825 = scmp.lt.s32.totalorder %s19, 0
      %s826 = scalar_select %p825, %s19, 0
      %s827 = smul.addr %s824, 16
      %s828 = sadd.s32 %s826, %s827
      %s829 = smul.addr %s828, 8
      %s830 = scalar_lea.vmem %s3, %s829
      // Predicated region
      $region40: #{graph_conv2d_edge.1} parent=31 // pred_check
        %p831 = pneg %p121
      $region41: #{graph_conv2d_edge.1} parent=31 // pred_check_branch
        %833 = sbr.rel (%p831) target = $region43
      $region42: #{graph_conv2d_edge.1} parent=31 // pred_region
        _
      $region43: #{graph_conv2d_edge.1} parent=31 // pred_fallthru
        _
    $region32: #{graph_conv2d_edge.1} parent=5 // pred_fallthru
      _
    %p834 = scmp.le.s32.totalorder 2, %s9
    // Predicated region
    $region44: #{graph_conv2d_edge.1} parent=5 // pred_check
      %p835 = pneg %p834
    $region45: #{graph_conv2d_edge.1} parent=5 // pred_check_branch
      %837 = sbr.rel (%p835) target = $region47
    $region46: #{graph_conv2d_edge.1} parent=5 // pred_region
      %s838 = ssub.s32 %s9, 2
      // Predicated region
      $region48: #{graph_conv2d_edge.1} parent=46 // pred_check
        %p839 = pneg %p127
      $region49: #{graph_conv2d_edge.1} parent=46 // pred_check_branch
        %841 = sbr.rel (%p839) target = $region51
      $region50: #{graph_conv2d_edge.1} parent=46 // pred_region
        %p842 = scmp.lt.s32.totalorder %s20, 1
        %s843 = scalar_select %p842, %s20, 1
        %p844 = scmp.lt.s32.totalorder %s21, 0
        %s845 = scalar_select %p844, %s21, 0
        %s846 = smul.addr %s843, 16
        %s847 = sadd.s32 %s845, %s846
        %s848 = smul.addr %s847, 8
        %s849 = scalar_lea.vmem %s3, %s848
      $region51: #{graph_conv2d_edge.1} parent=46 // pred_fallthru
        _
    $region47: #{graph_conv2d_edge.1} parent=5 // pred_fallthru
      _
  $region6: #{graph_conv2d_edge.1} parent=0 // loop_footer
    %s13 = sadd.s32 1, %s9
  $region7: #{graph_conv2d_edge.1} parent=0 // loop_footer_branch
    %8 = sbr.rel target = $region3
  $region8: #{graph_conv2d_edge.1} parent=0 // loop_exit
    _

</llo_original>
